<compile_context>
chip_gen: v6e
topology: v6e:2x2x1
jax: 0.10.0
libtpu: 0.0.40
codegen_flags: <defaults>
</compile_context>

<pallas_src>
import math
import functools

import jax
import jax.numpy as jnp
from jax import lax
from jax.experimental import pallas as pl
from jax.experimental.pallas import tpu as pltpu


# --------------------------------------------------------------------------
# small math helpers (f32)
# --------------------------------------------------------------------------
def _layernorm(h, w, b, eps=1e-5):
    mu = jnp.mean(h, axis=-1, keepdims=True)
    xc = h - mu
    var = jnp.mean(xc * xc, axis=-1, keepdims=True)
    return xc * lax.rsqrt(var + eps) * w + b


def _new_gelu(x):
    c = math.sqrt(2.0 / math.pi)
    return 0.5 * x * (1.0 + jnp.tanh(c * (x + 0.044715 * x * x * x)))


def _round_up(a, b):
    return ((a + b - 1) // b) * b


# --------------------------------------------------------------------------
# kernel 1: LN1 + fused QKV projection over row tiles of flattened (B*T, C)
# --------------------------------------------------------------------------
def qkv_kernel(x_ref, ln1w_ref, ln1b_ref, wqkv_ref, bqkv_ref,
               q_ref, k_ref, v_ref):
    x = x_ref[...]                                        # (tr, C) f32
    C = x.shape[-1]
    h = _layernorm(x, ln1w_ref[...], ln1b_ref[...])       # f32
    hb = h.astype(jnp.bfloat16)                           # bf16 MXU operand
    qkv = jnp.dot(hb, wqkv_ref[...],
                  preferred_element_type=jnp.float32) + bqkv_ref[...]   # (tr, 3C) f32
    q_ref[...] = qkv[:, :C].astype(q_ref.dtype)
    k_ref[...] = qkv[:, C:2 * C].astype(k_ref.dtype)
    v_ref[...] = qkv[:, 2 * C:].astype(v_ref.dtype)


# --------------------------------------------------------------------------
# kernel 2: attention + out-proj + residual + LN2 + MLP + residual
# --------------------------------------------------------------------------
def attn_mlp_kernel(q_ref, k_ref, v_ref, x_ref,
                    wpo_ref, bpo_ref, ln2w_ref, ln2b_ref,
                    wfc_ref, bfc_ref, wp2_ref, bp2_ref,
                    o_ref, y_sc,
                    *, n_head, tq, t_real, causal, exp_dtype):
    q = q_ref[0]                                          # (tq, C)  bf16
    k = k_ref[0]                                          # (Tp, C)  bf16
    v = v_ref[0]                                          # (Tp, C)  bf16
    Tp, C = k.shape
    hd = C // n_head
    scale = 1.0 / math.sqrt(hd)

    # key mask (causal and/or sequence padding), shared by all heads
    mask = None
    if causal or (t_real < Tp):
        qi = pl.program_id(1)
        row = qi * tq + lax.broadcasted_iota(jnp.int32, (tq, Tp), 0)
        col = lax.broadcasted_iota(jnp.int32, (tq, Tp), 1)
        if causal:
            mask = col <= row
            if t_real < Tp:
                mask = jnp.logical_and(mask, col < t_real)
        else:
            mask = col < t_real

    nt_dims = (((1,), (1,)), ((), ()))        # contract head_dim of q and k
    for h in range(n_head):                   # static unrolled loop over heads
        sl = slice(h * hd, (h + 1) * hd)
        qh, kh, vh = q[:, sl], k[:, sl], v[:, sl]
        s = lax.dot_general(qh, kh, nt_dims,
                            preferred_element_type=jnp.float32) * scale  # (tq, Tp)
        if mask is not None:
            s = jnp.where(mask, s, -1e30)
        m = jnp.max(s, axis=-1, keepdims=True)                 # f32
        p = jnp.exp((s - m).astype(exp_dtype))                 # bf16 EUP on v6/v7
        denom = jnp.sum(p, axis=-1, keepdims=True, dtype=jnp.float32)
        yh = jnp.dot(p.astype(jnp.bfloat16), vh,
                     preferred_element_type=jnp.float32)       # (tq, hd) f32
        # normalization deferred to after P@V; write token-major into scratch
        y_sc[:, sl] = yh * pl.reciprocal(denom, approx=True)

    # output projection: single full-depth (tq, C) @ (C, C) contraction
    y_tok = y_sc[...]                                          # (tq, C) f32
    attn_out = jnp.dot(y_tok.astype(jnp.bfloat16), wpo_ref[...],
                       preferred_element_type=jnp.float32) + bpo_ref[...]
    x1 = x_ref[0] + attn_out                                   # residual (f32)

    # MLP branch
    h2 = _layernorm(x1, ln2w_ref[...], ln2b_ref[...])
    ff = jnp.dot(h2.astype(jnp.bfloat16), wfc_ref[...],
                 preferred_element_type=jnp.float32) + bfc_ref[...]
    ff = _new_gelu(ff)
    mlp = jnp.dot(ff.astype(jnp.bfloat16), wp2_ref[...],
                  preferred_element_type=jnp.float32) + bp2_ref[...]

    o_ref[0] = (x1 + mlp).astype(o_ref.dtype)


# --------------------------------------------------------------------------
# generation-aware knobs
# --------------------------------------------------------------------------
def _device_kind():
    try:
        return jax.devices()[0].device_kind.lower()
    except Exception:
        return ""


def _vmem_limit_bytes():
    kind = _device_kind()
    if "v7" in kind:
        return 48 * 1024 * 1024        # leave headroom out of v7x's 64 MiB / TC
    if "v5" in kind or "v6" in kind:
        return 96 * 1024 * 1024        # 128 MiB physical -> allow bigger tiles
    return None                        # unknown chip: keep compiler default


def _softmax_exp_dtype():
    kind = _device_kind()
    if "v6" in kind or "v7" in kind:
        return jnp.bfloat16            # bf16 EUP exp path
    return jnp.float32                 # v5e & older: keep exp in f32


def _compiler_params(dim_sem, vmem_limit):
    kw = dict(dimension_semantics=dim_sem)
    if vmem_limit is not None:
        kw["vmem_limit_bytes"] = vmem_limit
    return pltpu.CompilerParams(**kw)


def _const_spec(arr, grid_rank, single_buffer):
    nd = arr.ndim
    if grid_rank == 1:
        idx = lambda i, _n=nd: (0,) * _n
    else:
        idx = lambda b, i, _n=nd: (0,) * _n
    if single_buffer:
        # constant block index -> double-buffering it is pure VMEM waste
        return pl.BlockSpec(arr.shape, idx, pipeline_mode=pl.Buffered(1))
    return pl.BlockSpec(arr.shape, idx)


def _pick_row_tile(rows, c, vmem_budget):
    for t in (1024, 512, 256, 128, 64, 32, 16, 8):
        if rows % t:
            continue
        approx = t * c * 4 * 2 + 3 * t * c * 2 * 2 + 3 * c * c * 2
        if approx <= vmem_budget:
            return t
    return rows


def _pick_q_tile(t_pad):
    for t in (256, 128):
        if t_pad % t == 0 and t_pad > t:
            return t
    return t_pad


# --------------------------------------------------------------------------
# wrapper
# --------------------------------------------------------------------------
def _block_forward_impl(x, params, *, n_head, causal, single_buffer_consts,
                        exp_dtype):
    B, T, C = x.shape
    assert C % n_head == 0
    hd = C // n_head
    (ln1w, ln1b, wqkv, bqkv, wpo, bpo, ln2w, ln2b, wfc, bfc, wp2, bp2) = params

    bf16 = jnp.bfloat16
    vmem_limit = _vmem_limit_bytes()
    vmem_budget = int(0.6 * (vmem_limit or 64 * 1024 * 1024))
    sb = single_buffer_consts

    # one-time weight casts (wrapper side, cheap)
    wqkv_b = wqkv.astype(bf16)             # (C, 3C) fused q|k|v projection
    wpo_b = wpo.astype(bf16)               # (C, C)  token-major out projection
    wfc_b = wfc.astype(bf16)
    wp2_b = wp2.astype(bf16)

    # pad T so the query dim tiles to 128/256 rows (keys masked in-kernel)
    T_pad = _round_up(T, 128) if T > 128 else _round_up(T, 8)
    x_p = x if T_pad == T else jnp.pad(x, ((0, 0), (0, T_pad - T), (0, 0)))

    # ---------------- kernel 1: LN1 + fused QKV over flattened rows ----------
    rows = B * T_pad
    tr = _pick_row_tile(rows, C, vmem_budget)
    x2d = x_p.reshape(rows, C)
    row_spec = pl.BlockSpec((tr, C), lambda i: (i, 0))
    cost1 = pl.CostEstimate(
        flops=int(2 * rows * C * 3 * C + 10 * rows * C),
        transcendentals=int(rows),
        bytes_accessed=int(rows * C * 4 + 3 * C * C * 2 + rows * 3 * C * 2))

    q2, k2, v2 = pl.pallas_call(
        qkv_kernel,
        out_shape=(jax.ShapeDtypeStruct((rows, C), bf16),) * 3,
        grid_spec=pltpu.PrefetchScalarGridSpec(
            num_scalar_prefetch=0, grid=(rows // tr,),
            in_specs=[row_spec,
                      _const_spec(ln1w, 1, sb), _const_spec(ln1b, 1, sb),
                      _const_spec(wqkv_b, 1, sb), _const_spec(bqkv, 1, sb)],
            out_specs=(row_spec, row_spec, row_spec)),
        compiler_params=_compiler_params(("parallel",), vmem_limit),
        cost_estimate=cost1,
    )(x2d, ln1w, ln1b, wqkv_b, bqkv)

    # free reshapes back to (B, T_pad, C): no head-split transpose pass through
    # HBM -- kernel 2 slices heads out of the channel (lane) axis itself.
    qh = q2.reshape(B, T_pad, C)
    kh = k2.reshape(B, T_pad, C)
    vh = v2.reshape(B, T_pad, C)

    # -------- kernel 2: attention + out-proj + residual + LN2 + MLP ----------
    tq = _pick_q_tile(T_pad)
    n_qt = T_pad // tq
    cost2 = pl.CostEstimate(
        flops=int(4 * B * n_head * T_pad * T_pad * hd
                  + 18 * B * T_pad * C * C + 30 * B * T_pad * C),
        transcendentals=int(B * n_head * T_pad * T_pad + 4 * B * T_pad * C),
        bytes_accessed=int(B * T_pad * C * (2 * 3 + 4 + 4) + 10 * C * C * 2))

    q_spec = pl.BlockSpec((1, tq, C), lambda b, i: (b, i, 0))
    kv_spec = pl.BlockSpec((1, T_pad, C), lambda b, i: (b, 0, 0))
    x_spec = pl.BlockSpec((1, tq, C), lambda b, i: (b, i, 0))
    out_spec = pl.BlockSpec((1, tq, C), lambda b, i: (b, i, 0))

    kernel2 = functools.partial(attn_mlp_kernel, n_head=n_head, tq=tq,
                                t_real=T, causal=causal, exp_dtype=exp_dtype)
    out = pl.pallas_call(
        kernel2,
        out_shape=jax.ShapeDtypeStruct((B, T_pad, C), jnp.float32),
        grid_spec=pltpu.PrefetchScalarGridSpec(
            num_scalar_prefetch=0, grid=(B, n_qt),
            in_specs=[q_spec, kv_spec, kv_spec, x_spec,
                      _const_spec(wpo_b, 2, sb), _const_spec(bpo, 2, sb),
                      _const_spec(ln2w, 2, sb), _const_spec(ln2b, 2, sb),
                      _const_spec(wfc_b, 2, sb), _const_spec(bfc, 2, sb),
                      _const_spec(wp2_b, 2, sb), _const_spec(bp2, 2, sb)],
            out_specs=out_spec,
            scratch_shapes=[pltpu.VMEM((tq, C), jnp.float32)]),
        compiler_params=_compiler_params(("parallel", "parallel"), vmem_limit),
        cost_estimate=cost2,
    )(qh, kh, vh, x_p, wpo_b, bpo, ln2w, ln2b, wfc_b, bfc, wp2_b, bp2)

    if T_pad != T:
        out = out[:, :T, :]
    return out


def block_forward(x, params, *, n_head, causal=True):
    # First attempt: single-buffered constant-weight BlockSpecs + bf16 EUP exp
    # where the chip supports it.  Fall back to the fully conservative config
    # (default double buffering, f32 exp) if this jax/Mosaic version rejects it.
    try:
        return _block_forward_impl(x, params, n_head=n_head, causal=causal,
                                   single_buffer_consts=True,
                                   exp_dtype=_softmax_exp_dtype())
    except Exception:
        return _block_forward_impl(x, params, n_head=n_head, causal=causal,
                                   single_buffer_consts=False,
                                   exp_dtype=jnp.float32)


# ---------------- pure-JAX f32 reference (same math, for validation) ----------------
def block_reference(x, params, *, n_head, causal=True):
    (ln1w, ln1b, wqkv, bqkv, wpo, bpo, ln2w, ln2b, wfc, bfc, wp2, bp2) = params
    B, T, C = x.shape
    hd = C // n_head

    h = _layernorm(x, ln1w[0], ln1b[0])
    qkv = h @ wqkv + bqkv[0]
    q, k, v = jnp.split(qkv, 3, axis=-1)
    q = q.reshape(B, T, n_head, hd).transpose(0, 2, 1, 3)
    k = k.reshape(B, T, n_head, hd).transpose(0, 2, 1, 3)
    v = v.reshape(B, T, n_head, hd).transpose(0, 2, 1, 3)
    s = jnp.einsum("bhqd,bhkd->bhqk", q, k) / math.sqrt(hd)
    if causal:
        mask = jnp.tril(jnp.ones((T, T), dtype=bool))
        s = jnp.where(mask, s, -1e30)
    p = jax.nn.softmax(s, axis=-1)
    y = jnp.einsum("bhqk,bhkd->bhqd", p, v).transpose(0, 2, 1, 3).reshape(B, T, C)
    x = x + (y @ wpo + bpo[0])

    h2 = _layernorm(x, ln2w[0], ln2b[0])
    ff = _new_gelu(h2 @ wfc + bfc[0])
    return x + (ff @ wp2 + bp2[0])


def init_params(key, dim):
    ks = jax.random.split(key, 6)
    std = 0.02
    ln1w = jnp.ones((1, dim), jnp.float32)
    ln1b = jnp.zeros((1, dim), jnp.float32)
    ln2w = jnp.ones((1, dim), jnp.float32)
    ln2b = jnp.zeros((1, dim), jnp.float32)
    wqkv = std * jax.random.normal(ks[0], (dim, 3 * dim), jnp.float32)
    bqkv = std * jax.random.normal(ks[1], (1, 3 * dim), jnp.float32)
    wpo = std * jax.random.normal(ks[2], (dim, dim), jnp.float32)
    bpo = std * jax.random.normal(ks[3], (1, dim), jnp.float32)
    wfc = std * jax.random.normal(ks[4], (dim, 4 * dim), jnp.float32)
    bfc = jnp.zeros((1, 4 * dim), jnp.float32)
    wp2 = std * jax.random.normal(ks[5], (4 * dim, dim), jnp.float32)
    bp2 = jnp.zeros((1, dim), jnp.float32)
    return (ln1w, ln1b, wqkv, bqkv, wpo, bpo, ln2w, ln2b, wfc, bfc, wp2, bp2)


if __name__ == "__main__":
    B, T, C, n_head = 2, 8, 32, 4
    key = jax.random.PRNGKey(0)
    kx, kp = jax.random.split(key)
    x = jax.random.normal(kx, (B, T, C), jnp.float32)
    params = init_params(kp, C)

    out = block_forward(x, params, n_head=n_head, causal=True)
    out = jax.block_until_ready(out)

    ref = block_reference(x, params, n_head=n_head, causal=True)
    assert out.shape == (B, T, C)
    max_err = float(jnp.max(jnp.abs(out - ref)))
    # bf16 matmul operands with f32 accumulation -> relaxed tolerance vs f32 reference
    assert jnp.allclose(out, ref, atol=2e-2, rtol=2e-2), f"mismatch vs reference: {max_err}"
    print("KERNEL_OK")
</pallas_src>

<mosaic_0001>
module attributes {stable_mosaic.version = 11 : i64} {
  func.func @qkv_kernel(%arg0: i32, %arg1: memref<16x32xf32, #tpu.memory_space<vmem>>, %arg2: memref<1x32xf32, #tpu.memory_space<vmem>>, %arg3: memref<1x32xf32, #tpu.memory_space<vmem>>, %arg4: memref<32x96xbf16, #tpu.memory_space<vmem>>, %arg5: memref<1x96xf32, #tpu.memory_space<vmem>>, %arg6: memref<16x32xbf16, #tpu.memory_space<vmem>>, %arg7: memref<16x32xbf16, #tpu.memory_space<vmem>>, %arg8: memref<16x32xbf16, #tpu.memory_space<vmem>>) attributes {dimension_semantics = [#tpu.dimension_semantics<parallel>], iteration_bounds = array<i64: 1>, scalar_prefetch = 0 : i64, scratch_operands = 0 : i64, tpu.core_type = #tpu.core_type<tc>, window_params = [{transform_indices = @transform_0, window_bounds = array<i64: 16, 32>}, {pipeline_mode = #tpu.pipeline_mode<synchronous>, transform_indices = @transform_1, window_bounds = array<i64: 1, 32>}, {pipeline_mode = #tpu.pipeline_mode<synchronous>, transform_indices = @transform_2, window_bounds = array<i64: 1, 32>}, {pipeline_mode = #tpu.pipeline_mode<synchronous>, transform_indices = @transform_3, window_bounds = array<i64: 32, 96>}, {pipeline_mode = #tpu.pipeline_mode<synchronous>, transform_indices = @transform_4, window_bounds = array<i64: 1, 96>}, {transform_indices = @transform_5, window_bounds = array<i64: 16, 32>}, {transform_indices = @transform_6, window_bounds = array<i64: 16, 32>}, {transform_indices = @transform_7, window_bounds = array<i64: 16, 32>}]} {
    %c0 = arith.constant 0 : index
    %c0_0 = arith.constant 0 : index
    %0 = vector.load %arg1[%c0, %c0_0] : memref<16x32xf32, #tpu.memory_space<vmem>>, vector<16x32xf32>
    %c0_1 = arith.constant 0 : index
    %c0_2 = arith.constant 0 : index
    %1 = vector.load %arg2[%c0_1, %c0_2] : memref<1x32xf32, #tpu.memory_space<vmem>>, vector<1x32xf32>
    %c0_3 = arith.constant 0 : index
    %c0_4 = arith.constant 0 : index
    %2 = vector.load %arg3[%c0_3, %c0_4] : memref<1x32xf32, #tpu.memory_space<vmem>>, vector<1x32xf32>
    %cst = arith.constant dense<0.000000e+00> : vector<16xf32>
    %3 = vector.multi_reduction <add>, %0, %cst [1] : vector<16x32xf32> to vector<16xf32>
    %4 = vector.shape_cast %3 : vector<16xf32> to vector<16x1xf32>
    %cst_5 = arith.constant 3.200000e+01 : f32
    %5 = vector.broadcast %cst_5 : f32 to vector<16x1xf32>
    %6 = arith.divf %4, %5 : vector<16x1xf32>
    %7 = vector.broadcast %6 : vector<16x1xf32> to vector<16x32xf32>
    %8 = arith.subf %0, %7 : vector<16x32xf32>
    %9 = arith.mulf %8, %8 : vector<16x32xf32>
    %cst_6 = arith.constant dense<0.000000e+00> : vector<16xf32>
    %10 = vector.multi_reduction <add>, %9, %cst_6 [1] : vector<16x32xf32> to vector<16xf32>
    %11 = vector.shape_cast %10 : vector<16xf32> to vector<16x1xf32>
    %cst_7 = arith.constant 3.200000e+01 : f32
    %12 = vector.broadcast %cst_7 : f32 to vector<16x1xf32>
    %13 = arith.divf %11, %12 : vector<16x1xf32>
    %cst_8 = arith.constant 9.99999974E-6 : f32
    %14 = vector.broadcast %cst_8 : f32 to vector<16x1xf32>
    %15 = arith.addf %13, %14 : vector<16x1xf32>
    %16 = math.rsqrt %15 : vector<16x1xf32>
    %17 = vector.broadcast %16 : vector<16x1xf32> to vector<16x32xf32>
    %18 = arith.mulf %8, %17 : vector<16x32xf32>
    %19 = vector.broadcast %1 : vector<1x32xf32> to vector<16x32xf32>
    %20 = arith.mulf %18, %19 : vector<16x32xf32>
    %21 = vector.broadcast %2 : vector<1x32xf32> to vector<16x32xf32>
    %22 = arith.addf %20, %21 : vector<16x32xf32>
    %23 = arith.truncf %22 : vector<16x32xf32> to vector<16x32xbf16>
    %c0_9 = arith.constant 0 : index
    %c0_10 = arith.constant 0 : index
    %24 = vector.load %arg4[%c0_9, %c0_10] : memref<32x96xbf16, #tpu.memory_space<vmem>>, vector<32x96xbf16>
    %cst_11 = arith.constant dense<0.000000e+00> : vector<16x96xf32>
    %25 = tpu.matmul %23, %24, %cst_11 {dimension_numbers = #tpu.dot_dimension_numbers<[1], [0], [0], [1], [0, 0, 1, 1], [], []>} : vector<16x32xbf16>, vector<32x96xbf16>, vector<16x96xf32> -> vector<16x96xf32>
    %c0_12 = arith.constant 0 : index
    %c0_13 = arith.constant 0 : index
    %26 = vector.load %arg5[%c0_12, %c0_13] : memref<1x96xf32, #tpu.memory_space<vmem>>, vector<1x96xf32>
    %27 = vector.broadcast %26 : vector<1x96xf32> to vector<16x96xf32>
    %28 = arith.addf %25, %27 : vector<16x96xf32>
    %29 = vector.extract_strided_slice %28 {offsets = [0, 0], sizes = [16, 32], strides = [1, 1]} : vector<16x96xf32> to vector<16x32xf32>
    %30 = arith.truncf %29 : vector<16x32xf32> to vector<16x32xbf16>
    %c0_14 = arith.constant 0 : index
    %c0_15 = arith.constant 0 : index
    %31 = vector.load %arg6[%c0_14, %c0_15] : memref<16x32xbf16, #tpu.memory_space<vmem>>, vector<16x32xbf16>
    tpu.vector_store %arg6[%c0_14, %c0_15], %30 {strides = array<i32>} : memref<16x32xbf16, #tpu.memory_space<vmem>>, vector<16x32xbf16>,
    %32 = vector.extract_strided_slice %28 {offsets = [0, 32], sizes = [16, 32], strides = [1, 1]} : vector<16x96xf32> to vector<16x32xf32>
    %33 = arith.truncf %32 : vector<16x32xf32> to vector<16x32xbf16>
    %c0_16 = arith.constant 0 : index
    %c0_17 = arith.constant 0 : index
    %34 = vector.load %arg7[%c0_16, %c0_17] : memref<16x32xbf16, #tpu.memory_space<vmem>>, vector<16x32xbf16>
    tpu.vector_store %arg7[%c0_16, %c0_17], %33 {strides = array<i32>} : memref<16x32xbf16, #tpu.memory_space<vmem>>, vector<16x32xbf16>,
    %35 = vector.extract_strided_slice %28 {offsets = [0, 64], sizes = [16, 32], strides = [1, 1]} : vector<16x96xf32> to vector<16x32xf32>
    %36 = arith.truncf %35 : vector<16x32xf32> to vector<16x32xbf16>
    %c0_18 = arith.constant 0 : index
    %c0_19 = arith.constant 0 : index
    %37 = vector.load %arg8[%c0_18, %c0_19] : memref<16x32xbf16, #tpu.memory_space<vmem>>, vector<16x32xbf16>
    tpu.vector_store %arg8[%c0_18, %c0_19], %36 {strides = array<i32>} : memref<16x32xbf16, #tpu.memory_space<vmem>>, vector<16x32xbf16>,
    return
  }
  func.func @transform_0(%arg0: i32) -> (i32, i32) {
    %c0_i32 = arith.constant 0 : i32
    %c0_i32_0 = arith.constant 0 : i32
    return %arg0, %c0_i32 : i32, i32
  }
  func.func @transform_1(%arg0: i32) -> (i32, i32) {
    %c0_i32 = arith.constant 0 : i32
    %c0_i32_0 = arith.constant 0 : i32
    %c0_i32_1 = arith.constant 0 : i32
    return %c0_i32, %c0_i32_0 : i32, i32
  }
  func.func @transform_2(%arg0: i32) -> (i32, i32) {
    %c0_i32 = arith.constant 0 : i32
    %c0_i32_0 = arith.constant 0 : i32
    %c0_i32_1 = arith.constant 0 : i32
    return %c0_i32, %c0_i32_0 : i32, i32
  }
  func.func @transform_3(%arg0: i32) -> (i32, i32) {
    %c0_i32 = arith.constant 0 : i32
    %c0_i32_0 = arith.constant 0 : i32
    %c0_i32_1 = arith.constant 0 : i32
    return %c0_i32, %c0_i32_0 : i32, i32
  }
  func.func @transform_4(%arg0: i32) -> (i32, i32) {
    %c0_i32 = arith.constant 0 : i32
    %c0_i32_0 = arith.constant 0 : i32
    %c0_i32_1 = arith.constant 0 : i32
    return %c0_i32, %c0_i32_0 : i32, i32
  }
  func.func @transform_5(%arg0: i32) -> (i32, i32) {
    %c0_i32 = arith.constant 0 : i32
    %c0_i32_0 = arith.constant 0 : i32
    return %arg0, %c0_i32 : i32, i32
  }
  func.func @transform_6(%arg0: i32) -> (i32, i32) {
    %c0_i32 = arith.constant 0 : i32
    %c0_i32_0 = arith.constant 0 : i32
    return %arg0, %c0_i32 : i32, i32
  }
  func.func @transform_7(%arg0: i32) -> (i32, i32) {
    %c0_i32 = arith.constant 0 : i32
    %c0_i32_0 = arith.constant 0 : i32
    return %arg0, %c0_i32 : i32, i32
  }
}

module attributes {stable_mosaic.version = 11 : i64} {
  func.func @qkv_kernel(%arg0: i32, %arg1: memref<16x32xf32, #tpu.memory_space<vmem>>, %arg2: memref<1x32xf32, #tpu.memory_space<vmem>>, %arg3: memref<1x32xf32, #tpu.memory_space<vmem>>, %arg4: memref<32x96xbf16, #tpu.memory_space<vmem>>, %arg5: memref<1x96xf32, #tpu.memory_space<vmem>>, %arg6: memref<16x32xbf16, #tpu.memory_space<vmem>>, %arg7: memref<16x32xbf16, #tpu.memory_space<vmem>>, %arg8: memref<16x32xbf16, #tpu.memory_space<vmem>>) attributes {dimension_semantics = [#tpu.dimension_semantics<parallel>], iteration_bounds = array<i64: 1>, scalar_prefetch = 0 : i64, scratch_operands = 0 : i64, tpu.core_type = #tpu.core_type<tc>, window_params = [{transform_indices = @transform_0, window_bounds = array<i64: 16, 32>}, {pipeline_mode = #tpu.pipeline_mode<synchronous>, transform_indices = @transform_1, window_bounds = array<i64: 1, 32>}, {pipeline_mode = #tpu.pipeline_mode<synchronous>, transform_indices = @transform_2, window_bounds = array<i64: 1, 32>}, {pipeline_mode = #tpu.pipeline_mode<synchronous>, transform_indices = @transform_3, window_bounds = array<i64: 32, 96>}, {pipeline_mode = #tpu.pipeline_mode<synchronous>, transform_indices = @transform_4, window_bounds = array<i64: 1, 96>}, {transform_indices = @transform_5, window_bounds = array<i64: 16, 32>}, {transform_indices = @transform_6, window_bounds = array<i64: 16, 32>}, {transform_indices = @transform_7, window_bounds = array<i64: 16, 32>}]} {
    %c0 = arith.constant 0 : index
    %c0_0 = arith.constant 0 : index
    %0 = vector.load %arg1[%c0, %c0_0] : memref<16x32xf32, #tpu.memory_space<vmem>>, vector<16x32xf32>
    %c0_1 = arith.constant 0 : index
    %c0_2 = arith.constant 0 : index
    %1 = vector.load %arg2[%c0_1, %c0_2] : memref<1x32xf32, #tpu.memory_space<vmem>>, vector<1x32xf32>
    %c0_3 = arith.constant 0 : index
    %c0_4 = arith.constant 0 : index
    %2 = vector.load %arg3[%c0_3, %c0_4] : memref<1x32xf32, #tpu.memory_space<vmem>>, vector<1x32xf32>
    %cst = arith.constant dense<0.000000e+00> : vector<16xf32>
    %3 = vector.multi_reduction <add>, %0, %cst [1] : vector<16x32xf32> to vector<16xf32>
    %4 = vector.shape_cast %3 : vector<16xf32> to vector<16x1xf32>
    %cst_5 = arith.constant 3.200000e+01 : f32
    %5 = vector.broadcast %cst_5 : f32 to vector<16x1xf32>
    %6 = arith.divf %4, %5 : vector<16x1xf32>
    %7 = vector.broadcast %6 : vector<16x1xf32> to vector<16x32xf32>
    %8 = arith.subf %0, %7 : vector<16x32xf32>
    %9 = arith.mulf %8, %8 : vector<16x32xf32>
    %cst_6 = arith.constant dense<0.000000e+00> : vector<16xf32>
    %10 = vector.multi_reduction <add>, %9, %cst_6 [1] : vector<16x32xf32> to vector<16xf32>
    %11 = vector.shape_cast %10 : vector<16xf32> to vector<16x1xf32>
    %cst_7 = arith.constant 3.200000e+01 : f32
    %12 = vector.broadcast %cst_7 : f32 to vector<16x1xf32>
    %13 = arith.divf %11, %12 : vector<16x1xf32>
    %cst_8 = arith.constant 9.99999974E-6 : f32
    %14 = vector.broadcast %cst_8 : f32 to vector<16x1xf32>
    %15 = arith.addf %13, %14 : vector<16x1xf32>
    %16 = math.rsqrt %15 : vector<16x1xf32>
    %17 = vector.broadcast %16 : vector<16x1xf32> to vector<16x32xf32>
    %18 = arith.mulf %8, %17 : vector<16x32xf32>
    %19 = vector.broadcast %1 : vector<1x32xf32> to vector<16x32xf32>
    %20 = arith.mulf %18, %19 : vector<16x32xf32>
    %21 = vector.broadcast %2 : vector<1x32xf32> to vector<16x32xf32>
    %22 = arith.addf %20, %21 : vector<16x32xf32>
    %23 = arith.truncf %22 : vector<16x32xf32> to vector<16x32xbf16>
    %c0_9 = arith.constant 0 : index
    %c0_10 = arith.constant 0 : index
    %24 = vector.load %arg4[%c0_9, %c0_10] : memref<32x96xbf16, #tpu.memory_space<vmem>>, vector<32x96xbf16>
    %cst_11 = arith.constant dense<0.000000e+00> : vector<16x96xf32>
    %25 = tpu.matmul %23, %24, %cst_11 {dimension_numbers = #tpu.dot_dimension_numbers<[1], [0], [0], [1], [0, 0, 1, 1], [], []>} : vector<16x32xbf16>, vector<32x96xbf16>, vector<16x96xf32> -> vector<16x96xf32>
    %c0_12 = arith.constant 0 : index
    %c0_13 = arith.constant 0 : index
    %26 = vector.load %arg5[%c0_12, %c0_13] : memref<1x96xf32, #tpu.memory_space<vmem>>, vector<1x96xf32>
    %27 = vector.broadcast %26 : vector<1x96xf32> to vector<16x96xf32>
    %28 = arith.addf %25, %27 : vector<16x96xf32>
    %29 = vector.extract_strided_slice %28 {offsets = [0, 0], sizes = [16, 32], strides = [1, 1]} : vector<16x96xf32> to vector<16x32xf32>
    %30 = arith.truncf %29 : vector<16x32xf32> to vector<16x32xbf16>
    %c0_14 = arith.constant 0 : index
    %c0_15 = arith.constant 0 : index
    %31 = vector.load %arg6[%c0_14, %c0_15] : memref<16x32xbf16, #tpu.memory_space<vmem>>, vector<16x32xbf16>
    tpu.vector_store %arg6[%c0_14, %c0_15], %30 {strides = array<i32>} : memref<16x32xbf16, #tpu.memory_space<vmem>>, vector<16x32xbf16>,
    %32 = vector.extract_strided_slice %28 {offsets = [0, 32], sizes = [16, 32], strides = [1, 1]} : vector<16x96xf32> to vector<16x32xf32>
    %33 = arith.truncf %32 : vector<16x32xf32> to vector<16x32xbf16>
    %c0_16 = arith.constant 0 : index
    %c0_17 = arith.constant 0 : index
    %34 = vector.load %arg7[%c0_16, %c0_17] : memref<16x32xbf16, #tpu.memory_space<vmem>>, vector<16x32xbf16>
    tpu.vector_store %arg7[%c0_16, %c0_17], %33 {strides = array<i32>} : memref<16x32xbf16, #tpu.memory_space<vmem>>, vector<16x32xbf16>,
    %35 = vector.extract_strided_slice %28 {offsets = [0, 64], sizes = [16, 32], strides = [1, 1]} : vector<16x96xf32> to vector<16x32xf32>
    %36 = arith.truncf %35 : vector<16x32xf32> to vector<16x32xbf16>
    %c0_18 = arith.constant 0 : index
    %c0_19 = arith.constant 0 : index
    %37 = vector.load %arg8[%c0_18, %c0_19] : memref<16x32xbf16, #tpu.memory_space<vmem>>, vector<16x32xbf16>
    tpu.vector_store %arg8[%c0_18, %c0_19], %36 {strides = array<i32>} : memref<16x32xbf16, #tpu.memory_space<vmem>>, vector<16x32xbf16>,
    return
  }
  func.func @transform_0(%arg0: i32) -> (i32, i32) {
    %c0_i32 = arith.constant 0 : i32
    %c0_i32_0 = arith.constant 0 : i32
    return %arg0, %c0_i32 : i32, i32
  }
  func.func @transform_1(%arg0: i32) -> (i32, i32) {
    %c0_i32 = arith.constant 0 : i32
    %c0_i32_0 = arith.constant 0 : i32
    %c0_i32_1 = arith.constant 0 : i32
    return %c0_i32, %c0_i32_0 : i32, i32
  }
  func.func @transform_2(%arg0: i32) -> (i32, i32) {
    %c0_i32 = arith.constant 0 : i32
    %c0_i32_0 = arith.constant 0 : i32
    %c0_i32_1 = arith.constant 0 : i32
    return %c0_i32, %c0_i32_0 : i32, i32
  }
  func.func @transform_3(%arg0: i32) -> (i32, i32) {
    %c0_i32 = arith.constant 0 : i32
    %c0_i32_0 = arith.constant 0 : i32
    %c0_i32_1 = arith.constant 0 : i32
    return %c0_i32, %c0_i32_0 : i32, i32
  }
  func.func @transform_4(%arg0: i32) -> (i32, i32) {
    %c0_i32 = arith.constant 0 : i32
    %c0_i32_0 = arith.constant 0 : i32
    %c0_i32_1 = arith.constant 0 : i32
    return %c0_i32, %c0_i32_0 : i32, i32
  }
  func.func @transform_5(%arg0: i32) -> (i32, i32) {
    %c0_i32 = arith.constant 0 : i32
    %c0_i32_0 = arith.constant 0 : i32
    return %arg0, %c0_i32 : i32, i32
  }
  func.func @transform_6(%arg0: i32) -> (i32, i32) {
    %c0_i32 = arith.constant 0 : i32
    %c0_i32_0 = arith.constant 0 : i32
    return %arg0, %c0_i32 : i32, i32
  }
  func.func @transform_7(%arg0: i32) -> (i32, i32) {
    %c0_i32 = arith.constant 0 : i32
    %c0_i32_0 = arith.constant 0 : i32
    return %arg0, %c0_i32 : i32, i32
  }
}

</mosaic_0001>

<llo_original>
// kernel: tpu_custom_call.1
$region0: #{tpu_custom_call.1}
  #allocation0 [shape = 'u32[]', space=smem, size = 0x4, offset = 0x4, fixed_abs, tag = 'smem constant byte address 0x4 - core index']
  #allocation1 [shape = 'u32[144,128]{1,0:T(1,128)}', space=vmem, size = 0x12000, scoped, tag = 'internal scratch']
  %s0 = inlined_call_operand.hbm [shape: f32[16,32], index: 0, kind: input, shape index: {}]
  %s1 = inlined_call_operand.vmem [shape: f32[1,32], index: 1, kind: input, shape index: {}]
  %s2 = inlined_call_operand.vmem [shape: f32[1,32], index: 2, kind: input, shape index: {}]
  %s3 = inlined_call_operand.hbm [shape: bf16[32,96], index: 3, kind: input, shape index: {}]
  %s4 = inlined_call_operand.vmem [shape: f32[1,96], index: 4, kind: input, shape index: {}]
  %s5 = inlined_call_operand.hbm [shape: bf16[16,32], index: 5, kind: output, shape index: {0}]
  %s6 = inlined_call_operand.hbm [shape: bf16[16,32], index: 6, kind: output, shape index: {1}]
  %s7 = inlined_call_operand.hbm [shape: bf16[16,32], index: 7, kind: output, shape index: {2}]
  %8 = xla_tuple %s5, %s6, %s7
  %s9 = sld [smem:[#allocation0]]
  $region54: #{tpu_custom_call.1} parent=0
    _
  %s11 = ssub.s32 1, %s9
  %s12 = scalar_select 0, %s11, %s9
  $region1: #{tpu_custom_call.1} parent=0
    #allocation2 [shape = 'u8[8192]{0}', space=vmem, size = 0x2000, scoped, tag = 'input window, operand 0, single buffered']
    #allocation3 [shape = 's32[1]{0}', space=sflag, size = 0x4, scoped, tag = 'scoped memory for tpu_custom_call.1']
    #allocation4 [shape = 's32[1]{0}', space=sflag, size = 0x4, scoped, tag = 'scoped memory for tpu_custom_call.1']
    #allocation5 [shape = 'u8[8192]{0}', space=vmem, size = 0x2000, scoped, tag = 'input window, operand 3, single buffered']
    #allocation6 [shape = 's32[1]{0}', space=sflag, size = 0x4, scoped, tag = 'scoped memory for tpu_custom_call.1']
    #allocation7 [shape = 'u8[4096]{0}', space=vmem, size = 0x1000, scoped, tag = 'output window, operand 0, single buffered']
    #allocation8 [shape = 'u8[4096]{0}', space=vmem, size = 0x1000, scoped, tag = 'output window, operand 1, single buffered']
    #allocation9 [shape = 's32[1]{0}', space=sflag, size = 0x4, scoped, tag = 'scoped memory for tpu_custom_call.1']
    #allocation10 [shape = 'u8[4096]{0}', space=vmem, size = 0x1000, scoped, tag = 'output window, operand 2, single buffered']
    %13 = vsyncpa [#allocation3], 0
    %14 = vsyncpa [#allocation6], 0
    %15 = vsyncpa [#allocation4], 0
    %16 = vsyncpa [#allocation9], 0
    // Predicated region
    $region2: #{tpu_custom_call.1} parent=1 // pred_check
      _
    $region3: #{tpu_custom_call.1} parent=1 // pred_check_branch
      %18 = sbr.rel (0) target = $region5
    $region4: #{tpu_custom_call.1} parent=1 // pred_region
      %s20 = ssub.s32 256, 256
      %21 = vsyncadd [#allocation3], %s20
      %s22 = sshll.u32 [#allocation2], 4
      %s23 = int_to_ptr.vmem [resolvable:$true] %s22
      %28 = dma.hbm_to_vmem [thread:$0]  %s0, 256, %s23, [#allocation3], 128, 128, 8
    $region5: #{tpu_custom_call.1} parent=1 // pred_fallthru
      _
    // Predicated region
    $region6: #{tpu_custom_call.1} parent=1 // pred_check
      _
    $region7: #{tpu_custom_call.1} parent=1 // pred_check_branch
      %30 = sbr.rel (0) target = $region9
    $region8: #{tpu_custom_call.1} parent=1 // pred_region
      _
    $region9: #{tpu_custom_call.1} parent=1 // pred_fallthru
      _
    // Predicated region
    $region10: #{tpu_custom_call.1} parent=1 // pred_check
      _
    $region11: #{tpu_custom_call.1} parent=1 // pred_check_branch
      %32 = sbr.rel (0) target = $region13
    $region12: #{tpu_custom_call.1} parent=1 // pred_region
      _
    $region13: #{tpu_custom_call.1} parent=1 // pred_fallthru
      _
    // Predicated region
    $region14: #{tpu_custom_call.1} parent=1 // pred_check
      _
    $region15: #{tpu_custom_call.1} parent=1 // pred_check_branch
      %34 = sbr.rel (0) target = $region17
    $region16: #{tpu_custom_call.1} parent=1 // pred_region
      %s36 = ssub.s32 256, 256
      %37 = vsyncadd [#allocation6], %s36
      %s38 = sshll.u32 [#allocation5], 4
      %s39 = int_to_ptr.vmem [resolvable:$true] %s38
      %44 = dma.hbm_to_vmem [thread:$0]  %s3, 256, %s39, [#allocation6], 64, 64, 4
    $region17: #{tpu_custom_call.1} parent=1 // pred_fallthru
      _
    // Predicated region
    $region18: #{tpu_custom_call.1} parent=1 // pred_check
      _
    $region19: #{tpu_custom_call.1} parent=1 // pred_check_branch
      %46 = sbr.rel (0) target = $region21
    $region20: #{tpu_custom_call.1} parent=1 // pred_region
      _
    $region21: #{tpu_custom_call.1} parent=1 // pred_fallthru
      _
    // Predicated region
    $region22: #{tpu_custom_call.1} parent=1 // pred_check
      _
    $region23: #{tpu_custom_call.1} parent=1 // pred_check_branch
      %48 = sbr.rel (0) target = $region25
    $region24: #{tpu_custom_call.1} parent=1 // pred_region
      %49 = dma.done [#allocation3], 256
    $region25: #{tpu_custom_call.1} parent=1 // pred_fallthru
      _
    // Predicated region
    $region26: #{tpu_custom_call.1} parent=1 // pred_check
      _
    $region27: #{tpu_custom_call.1} parent=1 // pred_check_branch
      %51 = sbr.rel (0) target = $region29
    $region28: #{tpu_custom_call.1} parent=1 // pred_region
      %52 = dma.done [#allocation6], 256
    $region29: #{tpu_custom_call.1} parent=1 // pred_fallthru
      _
    %v54 = vld [vmem:[#allocation2] sm:$0xff]
    %v55 = vld [vmem:[#allocation2 + $0x8] sm:$0xff]
    %v56 = vld [vmem:[%s1] sm:$0x1]
    %v57 = vld [vmem:[%s2] sm:$0x1]
    %vm58 = vcmask 261120
    %v59 = vsel %vm58, %v54, 0.0
    %60 = vadd.xlane.f32.xlu0 %v59
    %v61 = vpop.xlane.xlu0 %60
    %v62 = vsel %vm58, %v55, 0.0
    %63 = vadd.xlane.f32.xlu0 %v62
    %v64 = vpop.xlane.xlu0 %63
    %v65 = vrcp.pop 32.0
    %v66 = vmul.f32 %v61, %v65
    %v67 = vmul.f32 %v64, %v65
    %v68 = vsub.f32 %v54, %v66
    %v69 = vsub.f32 %v55, %v67
    %v70 = vmul.f32 %v68, %v68
    %v71 = vmul.f32 %v69, %v69
    %v72 = vsel %vm58, %v70, 0.0
    %73 = vadd.xlane.f32.xlu0 %v72
    %v74 = vpop.xlane.xlu0 %73
    %v75 = vsel %vm58, %v71, 0.0
    %76 = vadd.xlane.f32.xlu0 %v75
    %v77 = vpop.xlane.xlu0 %76
    %v78 = vmul.f32 %v74, %v65
    %v79 = vmul.f32 %v77, %v65
    %v80 = vadd.f32 %v78, 1e-05
    %v81 = vadd.f32 %v79, 1e-05
    %v82 = vrsqrt.pop %v80
    %v83 = vrsqrt.pop %v81
    %v84 = vmul.f32 %v68, %v82
    %v85 = vmul.f32 %v69, %v83
    %v87 = vlaneseq
    %v88 = vshrl.u32 %v87, 7
    %v89 = vsub.s32 0, %v88
    %v90 = vrot.slane %v56, %v89
    %v92 = vmul.f32 %v84, %v90
    %v93 = vmul.f32 %v85, %v90
    %v95 = vlaneseq
    %v96 = vshrl.u32 %v95, 7
    %v97 = vsub.s32 0, %v96
    %v98 = vrot.slane %v57, %v97
    %v100 = vadd.f32 %v92, %v98
    %v101 = vadd.f32 %v93, %v98
    %v102 = vpack.c.bf16 %v101, %v100
    %v103 = vld [vmem:[#allocation5] sm:$0xf]
    %v104 = vld [vmem:[#allocation5 + $0x4] sm:$0xf]
    %v105 = vld [vmem:[#allocation5 + $0x8] sm:$0xf]
    %v106 = vld [vmem:[#allocation5 + $0xc] sm:$0xf]
    %v107 = vld [vmem:[%s4] sm:$0x1]
    %v109 = vlaneseq
    %v110 = vshrl.u32 %v109, 7
    %v111 = vsub.s32 0, %v110
    %v112 = vrot.slane %v107, %v111
    %v118 = vunpack.c.l.b16 %v103
    %v119 = vunpack.c.l.b16 %v104
    %v120 = vunpack.c.l.b16 %v105
    %v121 = vunpack.c.l.b16 %v106
    %v122 = vpack.c.b16 %v119, %v118
    %v123 = vpack.c.b16 %v121, %v120
    %v127 = vsel %vm58, %v102, 0
    %129 = vmatprep.subr.bf16.mxu0 0
    %130 = vmatpush1.bf16.msra.mxu0 0
    %131 = vmatprep.subr.bf16.mxu0 0
    %132 = vmatpush1.bf16.msra.mxu0 0
    %133 = vmatprep.subr.bf16.mxu0 0
    %134 = vmatpush1.bf16.msra.mxu0 0
    %135 = vmatprep.subr.bf16.mxu0 0
    %136 = vmatpush1.bf16.msra.mxu0 0
    %137 = vmatprep.subr.bf16.mxu0 0
    %138 = vmatpush1.bf16.msra.mxu0 0
    %139 = vmatprep.subr.bf16.mxu0 0
    %140 = vmatpush1.bf16.msra.mxu0 0
    %141 = vmatprep.subr.bf16.mxu0 0
    %142 = vmatpush1.bf16.msra.mxu0 %v123
    %143 = vmatprep.subr.bf16.mxu0 0
    %144 = vmatpush1.bf16.msra.mxu0 %v122
    %145 = vmatprep.subr.bf16.mxu0 0
    %146 = vmatpush2.bf16.msra.mxu0 0
    %147 = vmatprep.subr.bf16.mxu0 0
    %148 = vmatpush2.bf16.msra.mxu0 0
    %149 = vmatprep.subr.bf16.mxu0 0
    %150 = vmatpush2.bf16.msra.mxu0 0
    %151 = vmatprep.subr.bf16.mxu0 0
    %152 = vmatpush2.bf16.msra.mxu0 0
    %153 = vmatprep.subr.bf16.mxu0 0
    %154 = vmatpush2.bf16.msra.mxu0 0
    %155 = vmatprep.subr.bf16.mxu0 0
    %156 = vmatpush2.bf16.msra.mxu0 0
    %157 = vmatprep.subr.bf16.mxu0 0
    %158 = vmatpush2.bf16.msra.mxu0 0
    %159 = vmatprep.subr.bf16.mxu0 0
    %160 = vmatpush2.bf16.msra.mxu0 0
    %161 = vmatprep.mubr.bf16.mxu0 0
    %162 = vmatmul.mubr.bf16.gmra.mxu0 %v127
    %v163 = vpop.f32.mrf.mxu0
    %v164 = vadd.f32 %v112, %v163
    %v165 = vpop.f32.mrf.mxu0
    %v166 = vpop.f32.mrf.mxu0
    %v167 = vadd.f32 %v112, %v166
    %v168 = vpop.f32.mrf.mxu0
    %169 = vdwg.mxu0
    %v170 = vpack.c.bf16 %v167, %v164
    %v172 = vunpack.c.l.b16 %v170
    %v173 = vunpack.c.h.b16 %v170
    %v174 = vpack.c.b16 %v172, %v172
    %v175 = vpack.c.b16 %v173, %v173
    %vm178 = vcmask 257024
    %179 = vst.msk [vmem:[#allocation7] sm:$0xf] %vm178, %v174
    %180 = vst.msk [vmem:[#allocation7 + $0x4] sm:$0xf] %vm178, %v175
    %181 = vrot.lane.b32.xlu0 %v174, 96
    %v182 = vpop.permute.xlu0 %181
    %183 = vrot.lane.b32.xlu0 %v175, 96
    %v184 = vpop.permute.xlu0 %183
    %187 = vst.msk [vmem:[#allocation8] sm:$0xf] %vm178, %v182
    %188 = vst.msk [vmem:[#allocation8 + $0x4] sm:$0xf] %vm178, %v184
    %189 = vrot.lane.b32.xlu0 %v174, 64
    %v190 = vpop.permute.xlu0 %189
    %191 = vrot.lane.b32.xlu0 %v175, 64
    %v192 = vpop.permute.xlu0 %191
    %195 = vst.msk [vmem:[#allocation10] sm:$0xf] %vm178, %v190
    %196 = vst.msk [vmem:[#allocation10 + $0x4] sm:$0xf] %vm178, %v192
    // Predicated region
    $region30: #{tpu_custom_call.1} parent=1 // pred_check
      _
    $region31: #{tpu_custom_call.1} parent=1 // pred_check_branch
      %198 = sbr.rel (0) target = $region33
    $region32: #{tpu_custom_call.1} parent=1 // pred_region
      %s200 = ssub.s32 128, 128
      %201 = vsyncadd [#allocation4], %s200
      %s202 = sshll.u32 [#allocation7], 4
      %s203 = int_to_ptr.vmem [resolvable:$true] %s202
      %208 = dma.vmem_to_hbm [thread:$0]  %s203, 128, %s5, [#allocation4], 64, 64, 4
    $region33: #{tpu_custom_call.1} parent=1 // pred_fallthru
      _
    // Predicated region
    $region34: #{tpu_custom_call.1} parent=1 // pred_check
      _
    $region35: #{tpu_custom_call.1} parent=1 // pred_check_branch
      %210 = sbr.rel (0) target = $region37
    $region36: #{tpu_custom_call.1} parent=1 // pred_region
      %s212 = ssub.s32 128, 128
      %213 = vsyncadd [#allocation9], %s212
      %s214 = sshll.u32 [#allocation8], 4
      %s215 = int_to_ptr.vmem [resolvable:$true] %s214
      %220 = dma.vmem_to_hbm [thread:$0]  %s215, 128, %s6, [#allocation9], 64, 64, 4
    $region37: #{tpu_custom_call.1} parent=1 // pred_fallthru
      _
    // Predicated region
    $region38: #{tpu_custom_call.1} parent=1 // pred_check
      _
    $region39: #{tpu_custom_call.1} parent=1 // pred_check_branch
      %222 = sbr.rel (0) target = $region41
    $region40: #{tpu_custom_call.1} parent=1 // pred_region
      %s224 = ssub.s32 128, 128
      %225 = vsyncadd [#allocation9], %s224
      %s226 = sshll.u32 [#allocation10], 4
      %s227 = int_to_ptr.vmem [resolvable:$true] %s226
      %232 = dma.vmem_to_hbm [thread:$0]  %s227, 128, %s7, [#allocation9], 64, 64, 4
    $region41: #{tpu_custom_call.1} parent=1 // pred_fallthru
      _
    // Predicated region
    $region42: #{tpu_custom_call.1} parent=1 // pred_check
      _
    $region43: #{tpu_custom_call.1} parent=1 // pred_check_branch
      %234 = sbr.rel (0) target = $region45
    $region44: #{tpu_custom_call.1} parent=1 // pred_region
      %235 = dma.done [#allocation4], 128
    $region45: #{tpu_custom_call.1} parent=1 // pred_fallthru
      _
    // Predicated region
    $region46: #{tpu_custom_call.1} parent=1 // pred_check
      _
    $region47: #{tpu_custom_call.1} parent=1 // pred_check_branch
      %237 = sbr.rel (0) target = $region49
    $region48: #{tpu_custom_call.1} parent=1 // pred_region
      %238 = dma.done [#allocation9], 128
    $region49: #{tpu_custom_call.1} parent=1 // pred_fallthru
      _
    // Predicated region
    $region50: #{tpu_custom_call.1} parent=1 // pred_check
      _
    $region51: #{tpu_custom_call.1} parent=1 // pred_check_branch
      %240 = sbr.rel (0) target = $region53
    $region52: #{tpu_custom_call.1} parent=1 // pred_region
      %241 = dma.done [#allocation9], 128
    $region53: #{tpu_custom_call.1} parent=1 // pred_fallthru
      _
    %242 = vsyncpa [#allocation3], 1
    %243 = vsyncpa [#allocation6], 1
    %244 = vsyncpa [#allocation4], 1
    %245 = vsyncpa [#allocation9], 1

// kernel: tpu_custom_call.1
$region0: #{tpu_custom_call.1}
  #allocation0 [shape = 'u32[]', space=smem, size = 0x4, offset = 0x4, fixed_abs, tag = 'smem constant byte address 0x4 - core index']
  #allocation1 [shape = 'u32[144,128]{1,0:T(1,128)}', space=vmem, size = 0x12000, scoped, tag = 'internal scratch']
  %s0 = inlined_call_operand.hbm [shape: f32[16,32], index: 0, kind: input, shape index: {}]
  %s1 = inlined_call_operand.vmem [shape: f32[1,32], index: 1, kind: input, shape index: {}]
  %s2 = inlined_call_operand.vmem [shape: f32[1,32], index: 2, kind: input, shape index: {}]
  %s3 = inlined_call_operand.hbm [shape: bf16[32,96], index: 3, kind: input, shape index: {}]
  %s4 = inlined_call_operand.vmem [shape: f32[1,96], index: 4, kind: input, shape index: {}]
  %s5 = inlined_call_operand.hbm [shape: bf16[16,32], index: 5, kind: output, shape index: {0}]
  %s6 = inlined_call_operand.hbm [shape: bf16[16,32], index: 6, kind: output, shape index: {1}]
  %s7 = inlined_call_operand.hbm [shape: bf16[16,32], index: 7, kind: output, shape index: {2}]
  %8 = xla_tuple %s5, %s6, %s7
  %s9 = sld [smem:[#allocation0]]
  $region54: #{tpu_custom_call.1} parent=0
    _
  %s11 = ssub.s32 1, %s9
  %s12 = scalar_select 0, %s11, %s9
  $region1: #{tpu_custom_call.1} parent=0
    #allocation2 [shape = 'u8[8192]{0}', space=vmem, size = 0x2000, scoped, tag = 'input window, operand 0, single buffered']
    #allocation3 [shape = 's32[1]{0}', space=sflag, size = 0x4, scoped, tag = 'scoped memory for tpu_custom_call.1']
    #allocation4 [shape = 's32[1]{0}', space=sflag, size = 0x4, scoped, tag = 'scoped memory for tpu_custom_call.1']
    #allocation5 [shape = 'u8[8192]{0}', space=vmem, size = 0x2000, scoped, tag = 'input window, operand 3, single buffered']
    #allocation6 [shape = 's32[1]{0}', space=sflag, size = 0x4, scoped, tag = 'scoped memory for tpu_custom_call.1']
    #allocation7 [shape = 'u8[4096]{0}', space=vmem, size = 0x1000, scoped, tag = 'output window, operand 0, single buffered']
    #allocation8 [shape = 'u8[4096]{0}', space=vmem, size = 0x1000, scoped, tag = 'output window, operand 1, single buffered']
    #allocation9 [shape = 's32[1]{0}', space=sflag, size = 0x4, scoped, tag = 'scoped memory for tpu_custom_call.1']
    #allocation10 [shape = 'u8[4096]{0}', space=vmem, size = 0x1000, scoped, tag = 'output window, operand 2, single buffered']
    %13 = vsyncpa [#allocation3], 0
    %14 = vsyncpa [#allocation6], 0
    %15 = vsyncpa [#allocation4], 0
    %16 = vsyncpa [#allocation9], 0
    // Predicated region
    $region2: #{tpu_custom_call.1} parent=1 // pred_check
      _
    $region3: #{tpu_custom_call.1} parent=1 // pred_check_branch
      %18 = sbr.rel (0) target = $region5
    $region4: #{tpu_custom_call.1} parent=1 // pred_region
      %s20 = ssub.s32 256, 256
      %21 = vsyncadd [#allocation3], %s20
      %s22 = sshll.u32 [#allocation2], 4
      %s23 = int_to_ptr.vmem [resolvable:$true] %s22
      %28 = dma.hbm_to_vmem [thread:$0]  %s0, 256, %s23, [#allocation3], 128, 128, 8
    $region5: #{tpu_custom_call.1} parent=1 // pred_fallthru
      _
    // Predicated region
    $region6: #{tpu_custom_call.1} parent=1 // pred_check
      _
    $region7: #{tpu_custom_call.1} parent=1 // pred_check_branch
      %30 = sbr.rel (0) target = $region9
    $region8: #{tpu_custom_call.1} parent=1 // pred_region
      _
    $region9: #{tpu_custom_call.1} parent=1 // pred_fallthru
      _
    // Predicated region
    $region10: #{tpu_custom_call.1} parent=1 // pred_check
      _
    $region11: #{tpu_custom_call.1} parent=1 // pred_check_branch
      %32 = sbr.rel (0) target = $region13
    $region12: #{tpu_custom_call.1} parent=1 // pred_region
      _
    $region13: #{tpu_custom_call.1} parent=1 // pred_fallthru
      _
    // Predicated region
    $region14: #{tpu_custom_call.1} parent=1 // pred_check
      _
    $region15: #{tpu_custom_call.1} parent=1 // pred_check_branch
      %34 = sbr.rel (0) target = $region17
    $region16: #{tpu_custom_call.1} parent=1 // pred_region
      %s36 = ssub.s32 256, 256
      %37 = vsyncadd [#allocation6], %s36
      %s38 = sshll.u32 [#allocation5], 4
      %s39 = int_to_ptr.vmem [resolvable:$true] %s38
      %44 = dma.hbm_to_vmem [thread:$0]  %s3, 256, %s39, [#allocation6], 64, 64, 4
    $region17: #{tpu_custom_call.1} parent=1 // pred_fallthru
      _
    // Predicated region
    $region18: #{tpu_custom_call.1} parent=1 // pred_check
      _
    $region19: #{tpu_custom_call.1} parent=1 // pred_check_branch
      %46 = sbr.rel (0) target = $region21
    $region20: #{tpu_custom_call.1} parent=1 // pred_region
      _
    $region21: #{tpu_custom_call.1} parent=1 // pred_fallthru
      _
    // Predicated region
    $region22: #{tpu_custom_call.1} parent=1 // pred_check
      _
    $region23: #{tpu_custom_call.1} parent=1 // pred_check_branch
      %48 = sbr.rel (0) target = $region25
    $region24: #{tpu_custom_call.1} parent=1 // pred_region
      %49 = dma.done [#allocation3], 256
    $region25: #{tpu_custom_call.1} parent=1 // pred_fallthru
      _
    // Predicated region
    $region26: #{tpu_custom_call.1} parent=1 // pred_check
      _
    $region27: #{tpu_custom_call.1} parent=1 // pred_check_branch
      %51 = sbr.rel (0) target = $region29
    $region28: #{tpu_custom_call.1} parent=1 // pred_region
      %52 = dma.done [#allocation6], 256
    $region29: #{tpu_custom_call.1} parent=1 // pred_fallthru
      _
    %v54 = vld [vmem:[#allocation2] sm:$0xff]
    %v55 = vld [vmem:[#allocation2 + $0x8] sm:$0xff]
    %v56 = vld [vmem:[%s1] sm:$0x1]
    %v57 = vld [vmem:[%s2] sm:$0x1]
    %vm58 = vcmask 261120
    %v59 = vsel %vm58, %v54, 0.0
    %60 = vadd.xlane.f32.xlu0 %v59
    %v61 = vpop.xlane.xlu0 %60
    %v62 = vsel %vm58, %v55, 0.0
    %63 = vadd.xlane.f32.xlu0 %v62
    %v64 = vpop.xlane.xlu0 %63
    %v65 = vrcp.pop 32.0
    %v66 = vmul.f32 %v61, %v65
    %v67 = vmul.f32 %v64, %v65
    %v68 = vsub.f32 %v54, %v66
    %v69 = vsub.f32 %v55, %v67
    %v70 = vmul.f32 %v68, %v68
    %v71 = vmul.f32 %v69, %v69
    %v72 = vsel %vm58, %v70, 0.0
    %73 = vadd.xlane.f32.xlu0 %v72
    %v74 = vpop.xlane.xlu0 %73
    %v75 = vsel %vm58, %v71, 0.0
    %76 = vadd.xlane.f32.xlu0 %v75
    %v77 = vpop.xlane.xlu0 %76
    %v78 = vmul.f32 %v74, %v65
    %v79 = vmul.f32 %v77, %v65
    %v80 = vadd.f32 %v78, 1e-05
    %v81 = vadd.f32 %v79, 1e-05
    %v82 = vrsqrt.pop %v80
    %v83 = vrsqrt.pop %v81
    %v84 = vmul.f32 %v68, %v82
    %v85 = vmul.f32 %v69, %v83
    %v87 = vlaneseq
    %v88 = vshrl.u32 %v87, 7
    %v89 = vsub.s32 0, %v88
    %v90 = vrot.slane %v56, %v89
    %v92 = vmul.f32 %v84, %v90
    %v93 = vmul.f32 %v85, %v90
    %v95 = vlaneseq
    %v96 = vshrl.u32 %v95, 7
    %v97 = vsub.s32 0, %v96
    %v98 = vrot.slane %v57, %v97
    %v100 = vadd.f32 %v92, %v98
    %v101 = vadd.f32 %v93, %v98
    %v102 = vpack.c.bf16 %v101, %v100
    %v103 = vld [vmem:[#allocation5] sm:$0xf]
    %v104 = vld [vmem:[#allocation5 + $0x4] sm:$0xf]
    %v105 = vld [vmem:[#allocation5 + $0x8] sm:$0xf]
    %v106 = vld [vmem:[#allocation5 + $0xc] sm:$0xf]
    %v107 = vld [vmem:[%s4] sm:$0x1]
    %v109 = vlaneseq
    %v110 = vshrl.u32 %v109, 7
    %v111 = vsub.s32 0, %v110
    %v112 = vrot.slane %v107, %v111
    %v118 = vunpack.c.l.b16 %v103
    %v119 = vunpack.c.l.b16 %v104
    %v120 = vunpack.c.l.b16 %v105
    %v121 = vunpack.c.l.b16 %v106
    %v122 = vpack.c.b16 %v119, %v118
    %v123 = vpack.c.b16 %v121, %v120
    %v127 = vsel %vm58, %v102, 0
    %129 = vmatprep.subr.bf16.mxu0 0
    %130 = vmatpush1.bf16.msra.mxu0 0
    %131 = vmatprep.subr.bf16.mxu0 0
    %132 = vmatpush1.bf16.msra.mxu0 0
    %133 = vmatprep.subr.bf16.mxu0 0
    %134 = vmatpush1.bf16.msra.mxu0 0
    %135 = vmatprep.subr.bf16.mxu0 0
    %136 = vmatpush1.bf16.msra.mxu0 0
    %137 = vmatprep.subr.bf16.mxu0 0
    %138 = vmatpush1.bf16.msra.mxu0 0
    %139 = vmatprep.subr.bf16.mxu0 0
    %140 = vmatpush1.bf16.msra.mxu0 0
    %141 = vmatprep.subr.bf16.mxu0 0
    %142 = vmatpush1.bf16.msra.mxu0 %v123
    %143 = vmatprep.subr.bf16.mxu0 0
    %144 = vmatpush1.bf16.msra.mxu0 %v122
    %145 = vmatprep.subr.bf16.mxu0 0
    %146 = vmatpush2.bf16.msra.mxu0 0
    %147 = vmatprep.subr.bf16.mxu0 0
    %148 = vmatpush2.bf16.msra.mxu0 0
    %149 = vmatprep.subr.bf16.mxu0 0
    %150 = vmatpush2.bf16.msra.mxu0 0
    %151 = vmatprep.subr.bf16.mxu0 0
    %152 = vmatpush2.bf16.msra.mxu0 0
    %153 = vmatprep.subr.bf16.mxu0 0
    %154 = vmatpush2.bf16.msra.mxu0 0
    %155 = vmatprep.subr.bf16.mxu0 0
    %156 = vmatpush2.bf16.msra.mxu0 0
    %157 = vmatprep.subr.bf16.mxu0 0
    %158 = vmatpush2.bf16.msra.mxu0 0
    %159 = vmatprep.subr.bf16.mxu0 0
    %160 = vmatpush2.bf16.msra.mxu0 0
    %161 = vmatprep.mubr.bf16.mxu0 0
    %162 = vmatmul.mubr.bf16.gmra.mxu0 %v127
    %v163 = vpop.f32.mrf.mxu0
    %v164 = vadd.f32 %v112, %v163
    %v165 = vpop.f32.mrf.mxu0
    %v166 = vpop.f32.mrf.mxu0
    %v167 = vadd.f32 %v112, %v166
    %v168 = vpop.f32.mrf.mxu0
    %169 = vdwg.mxu0
    %v170 = vpack.c.bf16 %v167, %v164
    %v172 = vunpack.c.l.b16 %v170
    %v173 = vunpack.c.h.b16 %v170
    %v174 = vpack.c.b16 %v172, %v172
    %v175 = vpack.c.b16 %v173, %v173
    %vm178 = vcmask 257024
    %179 = vst.msk [vmem:[#allocation7] sm:$0xf] %vm178, %v174
    %180 = vst.msk [vmem:[#allocation7 + $0x4] sm:$0xf] %vm178, %v175
    %181 = vrot.lane.b32.xlu0 %v174, 96
    %v182 = vpop.permute.xlu0 %181
    %183 = vrot.lane.b32.xlu0 %v175, 96
    %v184 = vpop.permute.xlu0 %183
    %187 = vst.msk [vmem:[#allocation8] sm:$0xf] %vm178, %v182
    %188 = vst.msk [vmem:[#allocation8 + $0x4] sm:$0xf] %vm178, %v184
    %189 = vrot.lane.b32.xlu0 %v174, 64
    %v190 = vpop.permute.xlu0 %189
    %191 = vrot.lane.b32.xlu0 %v175, 64
    %v192 = vpop.permute.xlu0 %191
    %195 = vst.msk [vmem:[#allocation10] sm:$0xf] %vm178, %v190
    %196 = vst.msk [vmem:[#allocation10 + $0x4] sm:$0xf] %vm178, %v192
    // Predicated region
    $region30: #{tpu_custom_call.1} parent=1 // pred_check
      _
    $region31: #{tpu_custom_call.1} parent=1 // pred_check_branch
      %198 = sbr.rel (0) target = $region33
    $region32: #{tpu_custom_call.1} parent=1 // pred_region
      %s200 = ssub.s32 128, 128
      %201 = vsyncadd [#allocation4], %s200
      %s202 = sshll.u32 [#allocation7], 4
      %s203 = int_to_ptr.vmem [resolvable:$true] %s202
      %208 = dma.vmem_to_hbm [thread:$0]  %s203, 128, %s5, [#allocation4], 64, 64, 4
    $region33: #{tpu_custom_call.1} parent=1 // pred_fallthru
      _
    // Predicated region
    $region34: #{tpu_custom_call.1} parent=1 // pred_check
      _
    $region35: #{tpu_custom_call.1} parent=1 // pred_check_branch
      %210 = sbr.rel (0) target = $region37
    $region36: #{tpu_custom_call.1} parent=1 // pred_region
      %s212 = ssub.s32 128, 128
      %213 = vsyncadd [#allocation9], %s212
      %s214 = sshll.u32 [#allocation8], 4
      %s215 = int_to_ptr.vmem [resolvable:$true] %s214
      %220 = dma.vmem_to_hbm [thread:$0]  %s215, 128, %s6, [#allocation9], 64, 64, 4
    $region37: #{tpu_custom_call.1} parent=1 // pred_fallthru
      _
    // Predicated region
    $region38: #{tpu_custom_call.1} parent=1 // pred_check
      _
    $region39: #{tpu_custom_call.1} parent=1 // pred_check_branch
      %222 = sbr.rel (0) target = $region41
    $region40: #{tpu_custom_call.1} parent=1 // pred_region
      %s224 = ssub.s32 128, 128
      %225 = vsyncadd [#allocation9], %s224
      %s226 = sshll.u32 [#allocation10], 4
      %s227 = int_to_ptr.vmem [resolvable:$true] %s226
      %232 = dma.vmem_to_hbm [thread:$0]  %s227, 128, %s7, [#allocation9], 64, 64, 4
    $region41: #{tpu_custom_call.1} parent=1 // pred_fallthru
      _
    // Predicated region
    $region42: #{tpu_custom_call.1} parent=1 // pred_check
      _
    $region43: #{tpu_custom_call.1} parent=1 // pred_check_branch
      %234 = sbr.rel (0) target = $region45
    $region44: #{tpu_custom_call.1} parent=1 // pred_region
      %235 = dma.done [#allocation4], 128
    $region45: #{tpu_custom_call.1} parent=1 // pred_fallthru
      _
    // Predicated region
    $region46: #{tpu_custom_call.1} parent=1 // pred_check
      _
    $region47: #{tpu_custom_call.1} parent=1 // pred_check_branch
      %237 = sbr.rel (0) target = $region49
    $region48: #{tpu_custom_call.1} parent=1 // pred_region
      %238 = dma.done [#allocation9], 128
    $region49: #{tpu_custom_call.1} parent=1 // pred_fallthru
      _
    // Predicated region
    $region50: #{tpu_custom_call.1} parent=1 // pred_check
      _
    $region51: #{tpu_custom_call.1} parent=1 // pred_check_branch
      %240 = sbr.rel (0) target = $region53
    $region52: #{tpu_custom_call.1} parent=1 // pred_region
      %241 = dma.done [#allocation9], 128
    $region53: #{tpu_custom_call.1} parent=1 // pred_fallthru
      _
    %242 = vsyncpa [#allocation3], 1
    %243 = vsyncpa [#allocation6], 1
    %244 = vsyncpa [#allocation4], 1
    %245 = vsyncpa [#allocation9], 1

</llo_original>
